<compile_context>
chip_gen: v7x
topology: tpu7x:2x2x1
jax: 0.10.0
libtpu: 0.0.40
codegen_flags: <defaults>
</compile_context>

<pallas_src>
import math

import jax
import jax.numpy as jnp
from jax.experimental import pallas as pl
from jax.experimental.pallas import tpu as pltpu


# ----------------------------------------------------------------------------
# Helpers
# ----------------------------------------------------------------------------
def _interp_matrix(out_size: int, in_size: int) -> jnp.ndarray:
    """Bilinear interpolation matrix, PyTorch align_corners=False semantics."""
    scale = in_size / out_size
    i = jnp.arange(out_size, dtype=jnp.float32)
    src = jnp.maximum((i + 0.5) * scale - 0.5, 0.0)
    i0 = jnp.clip(jnp.floor(src).astype(jnp.int32), 0, in_size - 1)
    i1 = jnp.minimum(i0 + 1, in_size - 1)
    l1 = src - i0.astype(jnp.float32)
    l0 = 1.0 - l1
    w = (jax.nn.one_hot(i0, in_size, dtype=jnp.float32) * l0[:, None]
         + jax.nn.one_hot(i1, in_size, dtype=jnp.float32) * l1[:, None])
    return w


def _build_interp_operands(h_in, w_in, h_out, w_out, h_pad, w_pad, dtype):
    """Zero-padded row-interp matrix (h_pad, h_in) and transposed col-interp (w_in, w_pad)."""
    wh = _interp_matrix(h_out, h_in)
    ww = _interp_matrix(w_out, w_in)
    wh_pad = jnp.zeros((h_pad, h_in), jnp.float32).at[:h_out, :].set(wh)
    wwt_pad = jnp.zeros((w_in, w_pad), jnp.float32).at[:, :w_out].set(ww.T)
    return wh_pad.astype(dtype), wwt_pad.astype(dtype)


def _pick_row_tile(h_pad: int, target: int = 256) -> int:
    """Largest multiple of 8 that divides h_pad and is <= target (h_pad is a multiple of 32)."""
    best = 8
    for cand in range(8, min(h_pad, target) + 1, 8):
        if h_pad % cand == 0:
            best = cand
    return best


def _vmem_limit_bytes(h_in, w_in, w_pad, th, in_itemsize, out_itemsize):
    x_b = h_in * w_in * in_itemsize * 2      # image channel block, double buffered
    wh_b = th * h_in * in_itemsize * 2       # Wh row tile, double buffered
    wwt_b = w_in * w_pad * in_itemsize       # Ww^T, single buffered (invariant)
    out_b = th * w_pad * out_itemsize * 2    # output tile, double buffered
    tmp_b = (th * w_in + 2 * th * w_pad) * 4  # f32 intermediates in the kernel body
    est = x_b + wh_b + wwt_b + out_b + tmp_b
    return int(min(max(int(est * 1.5), 32 * 1024 * 1024), 64 * 1024 * 1024))


def _invariant_spec(block_shape, index_map):
    """BlockSpec for a grid-invariant operand; single-buffered when supported."""
    try:
        return pl.BlockSpec(block_shape, index_map, pipeline_mode=pl.Buffered(1))
    except (AttributeError, TypeError):
        return pl.BlockSpec(block_shape, index_map)


# ----------------------------------------------------------------------------
# Fused normalize + bilinear resize + pad kernel (writes into the batch canvas)
# ----------------------------------------------------------------------------
def _normalize_resize_into(canvas, batch_index, image, inv_std, bias,
                           wh_pad, wwt_pad, h_out, w_out, th, vmem_limit):
    """Resize `image` (C,H,W), apply (x-mean)/std, pad with zeros, and write it into
    canvas[batch_index] (canvas has shape (B, C, Hp, Wp)). Returns the updated canvas."""
    B, C, Hp, Wp = canvas.shape
    _, H, W = image.shape
    n_h = Hp // th
    cdt = wwt_pad.dtype           # MXU input dtype (bf16 by default)
    b_idx = int(batch_index)

    def kernel(canvas_ref, inv_ref, bias_ref, x_ref, wh_ref, wwt_ref, o_ref):
        del canvas_ref            # aliased output buffer; only written via o_ref blocks
        c = pl.program_id(0)
        h = pl.program_id(1)

        x = x_ref[0]                                                     # (H, W)
        t = jnp.dot(wh_ref[...], x, preferred_element_type=jnp.float32)  # (TH, W)  MXU
        r = jnp.dot(t.astype(cdt), wwt_ref[...],
                    preferred_element_type=jnp.float32)                  # (TH, Wp) MXU

        # Normalization folded post-resize: interp((x-mean)/std) == interp(x)/std - mean/std
        # (bilinear rows sum to 1).  Padded region stays exactly 0 via the validity mask.
        rows = jax.lax.broadcasted_iota(jnp.int32, r.shape, 0) + h * th
        cols = jax.lax.broadcasted_iota(jnp.int32, r.shape, 1)
        valid = (rows < h_out) & (cols < w_out)
        out = jnp.where(valid, r * inv_ref[c] + bias_ref[c], 0.0)
        o_ref[0, 0, :, :] = out.astype(o_ref.dtype)                      # single full-block store

    return pl.pallas_call(
        kernel,
        out_shape=jax.ShapeDtypeStruct((B, C, Hp, Wp), canvas.dtype),
        grid=(C, n_h),
        in_specs=[
            pl.BlockSpec(memory_space=pl.ANY),                        # canvas (aliased, unused)
            pl.BlockSpec(memory_space=pltpu.MemorySpace.SMEM),        # inv_std (C,)
            pl.BlockSpec(memory_space=pltpu.MemorySpace.SMEM),        # bias    (C,)
            pl.BlockSpec((1, H, W), lambda c, h: (c, 0, 0)),          # image channel
            pl.BlockSpec((th, H), lambda c, h: (h, 0)),               # Wh row tile
            _invariant_spec((W, Wp), lambda c, h: (0, 0)),            # Ww^T (grid-invariant)
        ],
        out_specs=pl.BlockSpec((1, 1, th, Wp), lambda c, h: (b_idx, c, h, 0)),
        input_output_aliases={0: 0},
        compiler_params=pltpu.CompilerParams(
            dimension_semantics=("parallel", "parallel"),
            vmem_limit_bytes=vmem_limit),
    )(canvas, inv_std, bias, image, wh_pad, wwt_pad)


# ----------------------------------------------------------------------------
# Box rescaling (plain jnp — (N,4) is too lane-sparse to be worth a Pallas launch)
# ----------------------------------------------------------------------------
def resize_boxes(boxes, original_size, new_size):
    rh = float(new_size[0]) / float(original_size[0])
    rw = float(new_size[1]) / float(original_size[1])
    scale = jnp.asarray([rw, rh, rw, rh], jnp.float32)
    return boxes.astype(jnp.float32) * scale


# ----------------------------------------------------------------------------
# Module wrapper
# ----------------------------------------------------------------------------
class GeneralizedRCNNTransformPallas:
    """Forward-pass equivalent of GeneralizedRCNNTransform (eval-mode size choice)."""

    def __init__(self, min_size, max_size, image_mean, image_std,
                 compute_dtype=jnp.bfloat16, out_dtype=jnp.float32, size_divisible=32):
        if not isinstance(min_size, (list, tuple)):
            min_size = (min_size,)
        self.min_size = min_size
        self.max_size = max_size
        mean = jnp.asarray(image_mean, dtype=jnp.float32)
        std = jnp.asarray(image_std, dtype=jnp.float32)
        self.image_mean = mean
        self.image_std = std
        self.inv_std = 1.0 / std
        self.bias = -mean / std
        self.compute_dtype = compute_dtype
        self.out_dtype = out_dtype
        self.size_divisible = int(size_divisible)
        # TODO(synk): training-mode torch_choice picks a random min_size; we use the
        # deterministic eval path (min_size[-1]) since RNG-over-list is host-side control.
        self.training = False

    def _resized_hw(self, h, w):
        size = float(self.min_size[-1])
        min_s = float(min(h, w))
        max_s = float(max(h, w))
        sf = size / min_s
        if max_s * sf > float(self.max_size):
            sf = float(self.max_size) / max_s
        # F.interpolate(scale_factor=sf, recompute_scale_factor=True): floor(in * sf)
        return int(math.floor(h * sf)), int(math.floor(w * sf))

    def __call__(self, images, targets=None):
        resized_sizes = []
        for img in images:
            assert img.ndim == 3, "images must be [C, H, W]"
            h, w = int(img.shape[-2]), int(img.shape[-1])
            resized_sizes.append(self._resized_hw(h, w))

        # batch_images: pad every image up to the batch max, rounded to size_divisible
        stride = self.size_divisible
        max_h = max(s[0] for s in resized_sizes)
        max_w = max(s[1] for s in resized_sizes)
        Hp = int(math.ceil(max_h / stride) * stride)
        Wp = int(math.ceil(max_w / stride) * stride)
        th = _pick_row_tile(Hp)

        B = len(images)
        C = int(images[0].shape[0])
        canvas = jnp.zeros((B, C, Hp, Wp), self.out_dtype)

        out_targets = list(targets) if targets is not None else None
        in_itemsize = jnp.dtype(self.compute_dtype).itemsize
        out_itemsize = jnp.dtype(self.out_dtype).itemsize

        for i, img in enumerate(images):
            h, w = int(img.shape[-2]), int(img.shape[-1])
            hout, wout = resized_sizes[i]
            wh_pad, wwt_pad = _build_interp_operands(h, w, hout, wout, Hp, Wp,
                                                     self.compute_dtype)
            vmem_limit = _vmem_limit_bytes(h, w, Wp, th, in_itemsize, out_itemsize)
            canvas = _normalize_resize_into(
                canvas, i, img.astype(self.compute_dtype), self.inv_std, self.bias,
                wh_pad, wwt_pad, hout, wout, th, vmem_limit)

            if targets is not None and targets[i] is not None:
                out_targets[i] = dict(targets[i])
                out_targets[i]["boxes"] = resize_boxes(targets[i]["boxes"], (h, w),
                                                       resized_sizes[i])

        image_list = (canvas, resized_sizes)   # ImageList equivalent
        return image_list, out_targets

    def postprocess(self, result, image_shapes, original_image_sizes):
        if self.training:
            return result
        out = list(result)
        for i, (pred, im_s, o_im_s) in enumerate(zip(result, image_shapes,
                                                     original_image_sizes)):
            out[i] = dict(pred)
            out[i]["boxes"] = resize_boxes(pred["boxes"], im_s, o_im_s)
        return out


# ----------------------------------------------------------------------------
# Demo / self-check
# ----------------------------------------------------------------------------
if __name__ == "__main__":
    key = jax.random.PRNGKey(0)
    k1, k2, k3, k4 = jax.random.split(key, 4)

    # small, deterministic inputs (batch of 2 variable-sized CHW images)
    img0 = jax.random.uniform(k1, (3, 16, 20), dtype=jnp.float32)
    img1 = jax.random.uniform(k2, (3, 18, 16), dtype=jnp.float32)
    images = [img0, img1]

    boxes0 = jax.random.uniform(k3, (8, 4), dtype=jnp.float32) * 16.0
    boxes1 = jax.random.uniform(k4, (8, 4), dtype=jnp.float32) * 16.0
    targets = [{"boxes": boxes0}, {"boxes": boxes1}]

    transform = GeneralizedRCNNTransformPallas(
        min_size=24, max_size=32,
        image_mean=[0.485, 0.456, 0.406],
        image_std=[0.229, 0.224, 0.225])

    (batched_imgs, image_sizes), out_targets = transform(images, targets)
    batched_imgs = jax.block_until_ready(batched_imgs)
    for t in out_targets:
        jax.block_until_ready(t["boxes"])

    # --- reference checks ---
    mean = jnp.asarray([0.485, 0.456, 0.406], jnp.float32)
    std = jnp.asarray([0.229, 0.224, 0.225], jnp.float32)
    inv_std = 1.0 / std
    bias = -mean * inv_std
    Hp, Wp = batched_imgs.shape[-2:]
    cdt = jnp.bfloat16

    ok = True
    for i, img in enumerate(images):
        H, W = img.shape[-2:]
        hout, wout = image_sizes[i]
        wh = _interp_matrix(hout, H)
        ww = _interp_matrix(wout, W)

        # Tight check: JAX reference that mirrors the kernel's numerics (bf16 MXU inputs,
        # f32 accumulation, normalization folded post-resize, zero-masked padding).
        wh_p = jnp.zeros((Hp, H), jnp.float32).at[:hout, :].set(wh).astype(cdt)
        wwt_p = jnp.zeros((W, Wp), jnp.float32).at[:, :wout].set(ww.T).astype(cdt)
        x_b = img.astype(cdt)
        t = jnp.einsum("oh,chw->cow", wh_p, x_b, preferred_element_type=jnp.float32)
        r = jnp.einsum("cow,wp->cop", t.astype(cdt), wwt_p,
                       preferred_element_type=jnp.float32)
        valid = (jnp.arange(Hp) < hout)[:, None] & (jnp.arange(Wp) < wout)[None, :]
        ref = jnp.where(valid[None], r * inv_std[:, None, None] + bias[:, None, None], 0.0)
        ok &= bool(jnp.allclose(batched_imgs[i], ref, atol=2e-3, rtol=2e-3))

        # Loose semantic check against the exact f32 normalize -> bilinear resize -> pad path.
        xn = (img - mean[:, None, None]) * inv_std[:, None, None]
        ref32 = jnp.einsum("oh,chw,pw->cop", wh, xn, ww)
        ref32 = jnp.pad(ref32, ((0, 0), (0, Hp - hout), (0, Wp - wout)))
        ok &= bool(jnp.allclose(batched_imgs[i], ref32, atol=1e-1, rtol=1e-1))

        # Box rescaling check.
        rh, rw = hout / H, wout / W
        scale = jnp.array([rw, rh, rw, rh], jnp.float32)
        orig = [boxes0, boxes1][i]
        ok &= bool(jnp.allclose(out_targets[i]["boxes"], orig * scale,
                                atol=1e-5, rtol=1e-5))

    assert ok, "Pallas output mismatch vs JAX reference"
    assert batched_imgs.shape == (2, 3, 32, 32)
    print("KERNEL_OK")
</pallas_src>

<mosaic_0001>
module attributes {stable_mosaic.version = 11 : i64} {
  func.func @kernel(%arg0: i32, %arg1: i32, %arg2: memref<2x3x32x32xf32, #tpu.memory_space<any>>, %arg3: memref<3xf32, #tpu.memory_space<smem>>, %arg4: memref<3xf32, #tpu.memory_space<smem>>, %arg5: memref<1x16x20xbf16, #tpu.memory_space<vmem>>, %arg6: memref<32x16xbf16, #tpu.memory_space<vmem>>, %arg7: memref<20x32xbf16, #tpu.memory_space<vmem>>, %arg8: memref<1x1x32x32xf32, #tpu.memory_space<vmem>>) attributes {dimension_semantics = [#tpu.dimension_semantics<parallel>, #tpu.dimension_semantics<parallel>], iteration_bounds = array<i64: 3, 1>, scalar_prefetch = 0 : i64, scratch_operands = 0 : i64, tpu.core_type = #tpu.core_type<tc>, window_params = [{}, {transform_indices = @transform_1, window_bounds = array<i64: 3>}, {transform_indices = @transform_2, window_bounds = array<i64: 3>}, {transform_indices = @transform_3, window_bounds = array<i64: 1, 16, 20>}, {transform_indices = @transform_4, window_bounds = array<i64: 32, 16>}, {pipeline_mode = #tpu.pipeline_mode<synchronous>, transform_indices = @transform_5, window_bounds = array<i64: 20, 32>}, {transform_indices = @transform_6, window_bounds = array<i64: 1, 1, 32, 32>}]} {
    %c0 = arith.constant 0 : index
    %c0_0 = arith.constant 0 : index
    %c0_1 = arith.constant 0 : index
    %0 = vector.load %arg5[%c0, %c0_0, %c0_1] : memref<1x16x20xbf16, #tpu.memory_space<vmem>>, vector<1x16x20xbf16>
    %1 = vector.shape_cast %0 : vector<1x16x20xbf16> to vector<16x20xbf16>
    %c0_2 = arith.constant 0 : index
    %c0_3 = arith.constant 0 : index
    %2 = vector.load %arg6[%c0_2, %c0_3] : memref<32x16xbf16, #tpu.memory_space<vmem>>, vector<32x16xbf16>
    %cst = arith.constant dense<0.000000e+00> : vector<32x20xf32>
    %3 = tpu.matmul %2, %1, %cst {dimension_numbers = #tpu.dot_dimension_numbers<[1], [0], [0], [1], [0, 0, 1, 1], [], []>} : vector<32x16xbf16>, vector<16x20xbf16>, vector<32x20xf32> -> vector<32x20xf32>
    %4 = arith.truncf %3 : vector<32x20xf32> to vector<32x20xbf16>
    %c0_4 = arith.constant 0 : index
    %c0_5 = arith.constant 0 : index
    %5 = vector.load %arg7[%c0_4, %c0_5] : memref<20x32xbf16, #tpu.memory_space<vmem>>, vector<20x32xbf16>
    %cst_6 = arith.constant dense<0.000000e+00> : vector<32x32xf32>
    %6 = tpu.matmul %4, %5, %cst_6 {dimension_numbers = #tpu.dot_dimension_numbers<[1], [0], [0], [1], [0, 0, 1, 1], [], []>} : vector<32x20xbf16>, vector<20x32xbf16>, vector<32x32xf32> -> vector<32x32xf32>
    %7 = tpu.iota {dimensions = array<i32: 0>} : vector<32x32xi32>
    %c32_i32 = arith.constant 32 : i32
    %8 = arith.muli %arg1, %c32_i32 : i32
    %9 = vector.broadcast %8 : i32 to vector<32x32xi32>
    %10 = arith.addi %7, %9 : vector<32x32xi32>
    %11 = tpu.iota {dimensions = array<i32: 1>} : vector<32x32xi32>
    %c24_i32 = arith.constant 24 : i32
    %12 = vector.broadcast %c24_i32 : i32 to vector<32x32xi32>
    %13 = arith.cmpi slt, %10, %12 : vector<32x32xi32>
    %c30_i32 = arith.constant 30 : i32
    %14 = vector.broadcast %c30_i32 : i32 to vector<32x32xi32>
    %15 = arith.cmpi slt, %11, %14 : vector<32x32xi32>
    %16 = arith.andi %13, %15 : vector<32x32xi1>
    %17 = arith.index_cast %arg0 : i32 to index
    %18 = memref.load %arg3[%17] : memref<3xf32, #tpu.memory_space<smem>>
    %19 = vector.broadcast %18 : f32 to vector<32x32xf32>
    %20 = arith.mulf %6, %19 : vector<32x32xf32>
    %21 = arith.index_cast %arg0 : i32 to index
    %22 = memref.load %arg4[%21] : memref<3xf32, #tpu.memory_space<smem>>
    %23 = vector.broadcast %22 : f32 to vector<32x32xf32>
    %24 = arith.addf %20, %23 : vector<32x32xf32>
    %cst_7 = arith.constant 0.000000e+00 : f32
    %25 = vector.broadcast %cst_7 : f32 to vector<32x32xf32>
    %26 = arith.select %16, %24, %25 : vector<32x32xi1>, vector<32x32xf32>
    %c0_8 = arith.constant 0 : index
    %c0_9 = arith.constant 0 : index
    %c0_10 = arith.constant 0 : index
    %c0_11 = arith.constant 0 : index
    %27 = vector.load %arg8[%c0_8, %c0_9, %c0_10, %c0_11] : memref<1x1x32x32xf32, #tpu.memory_space<vmem>>, vector<1x1x32x32xf32>
    %28 = vector.shape_cast %27 : vector<1x1x32x32xf32> to vector<32x32xf32>
    %29 = vector.shape_cast %26 : vector<32x32xf32> to vector<1x1x32x32xf32>
    tpu.vector_store %arg8[%c0_8, %c0_9, %c0_10, %c0_11], %29 {strides = array<i32>} : memref<1x1x32x32xf32, #tpu.memory_space<vmem>>, vector<1x1x32x32xf32>,
    return
  }
  func.func @transform_1(%arg0: i32, %arg1: i32) -> i32 {
    %c0_i32 = arith.constant 0 : i32
    %c0_i32_0 = arith.constant 0 : i32
    return %c0_i32 : i32
  }
  func.func @transform_2(%arg0: i32, %arg1: i32) -> i32 {
    %c0_i32 = arith.constant 0 : i32
    %c0_i32_0 = arith.constant 0 : i32
    return %c0_i32 : i32
  }
  func.func @transform_3(%arg0: i32, %arg1: i32) -> (i32, i32, i32) {
    %c0_i32 = arith.constant 0 : i32
    %c0_i32_0 = arith.constant 0 : i32
    %c0_i32_1 = arith.constant 0 : i32
    return %arg0, %c0_i32, %c0_i32_0 : i32, i32, i32
  }
  func.func @transform_4(%arg0: i32, %arg1: i32) -> (i32, i32) {
    %c0_i32 = arith.constant 0 : i32
    %c0_i32_0 = arith.constant 0 : i32
    return %arg1, %c0_i32 : i32, i32
  }
  func.func @transform_5(%arg0: i32, %arg1: i32) -> (i32, i32) {
    %c0_i32 = arith.constant 0 : i32
    %c0_i32_0 = arith.constant 0 : i32
    %c0_i32_1 = arith.constant 0 : i32
    return %c0_i32, %c0_i32_0 : i32, i32
  }
  func.func @transform_6(%arg0: i32, %arg1: i32) -> (i32, i32, i32, i32) {
    %c0_i32 = arith.constant 0 : i32
    %c0_i32_0 = arith.constant 0 : i32
    %c0_i32_1 = arith.constant 0 : i32
    return %c0_i32, %arg0, %arg1, %c0_i32_0 : i32, i32, i32, i32
  }
}

</mosaic_0001>

<llo_original>
// kernel: tpu_custom_call.1
$region0: #{tpu_custom_call.1}
  #allocation0 [shape = 'u32[]', space=smem, size = 0x4, offset = 0x4, fixed_abs, tag = 'smem constant byte address 0x4 - core index']
  #allocation1 [shape = 'u32[144,128]{1,0:T(1,128)}', space=vmem, size = 0x12000, scoped, tag = 'internal scratch']
  %s0 = inlined_call_operand.hbm [shape: f32[2,3,32,32], index: 0, kind: input, shape index: {}, may-alias: {0,6}]
  %s1 = inlined_call_operand.vmem [shape: f32[3], index: 1, kind: input, shape index: {}]
  %s2 = inlined_call_operand.vmem [shape: f32[3], index: 2, kind: input, shape index: {}]
  %s3 = inlined_call_operand.vmem [shape: bf16[3,16,20], index: 3, kind: input, shape index: {}]
  %s4 = inlined_call_operand.vmem [shape: bf16[32,16], index: 4, kind: input, shape index: {}]
  %s5 = inlined_call_operand.vmem [shape: bf16[20,32], index: 5, kind: input, shape index: {}]
  %s6 = inlined_call_operand.hbm [shape: f32[2,3,32,32], index: 6, kind: output, shape index: {}, may-alias: {0,6}]
  %s7 = sld [smem:[#allocation0]]
  $region61: #{tpu_custom_call.1} parent=0
    _
  %s9 = ssub.s32 1, %s7
  %s10 = scalar_select 0, %s9, %s7
  $region1: #{tpu_custom_call.1} parent=0
    #allocation2 [shape = 'u8[512]{0}', space=smem, size = 0x200, scoped, tag = 'input window, operand 1, single buffered']
    #allocation3 [shape = 's32[2]{0}', space=sflag, size = 0x8, scoped, tag = 'scoped memory for tpu_custom_call.1']
    #allocation4 [shape = 's32[2]{0}', space=sflag, size = 0x8, scoped, tag = 'scoped memory for tpu_custom_call.1']
    #allocation5 [shape = 'u8[512]{0}', space=smem, size = 0x200, scoped, tag = 'input window, operand 2, single buffered']
    #allocation6 [shape = 's32[1]{0}', space=sflag, size = 0x4, scoped, tag = 'scoped memory for tpu_custom_call.1']
    #allocation7 [shape = 'u8[32768]{0}', space=vmem, size = 0x8000, scoped, tag = 'output window, operand 0']
    %11 = vsyncpa [#allocation4], 0
    %12 = vsyncpa [#allocation6], 0
    %13 = vsyncpa [#allocation3], 0
    %s14 = scalar_lea.sflag [#allocation3], 1
    %15 = vsyncpa %s14, 0
    loop: start=0, step=1, limit=5
    $region2: #{tpu_custom_call.1} parent=1 // loop_pre_header
      _
    $region3: #{tpu_custom_call.1} parent=1 // loop_header
      %s17 = sphi 0, %s21
      %p18 = scmp.ge.s32.totalorder %s17, 5
      %s24 = sphi 0, %s36
      %s25 = sphi 0, %s32
      %s26 = sphi 0, %s24
      %s27 = sphi 0, %s25
      %s28 = sphi 0, %s26
      %s29 = sphi 0, %s27
      %s37 = sphi 0, %s37
      %s39 = sphi 0, %s37
      %s40 = sphi 0, %s39
      %s54 = sphi 0, %s40
      %s58 = sphi 0, %s58
      %s60 = sphi 0, %s58
      %s61 = sphi 0, %s60
      %s75 = sphi 0, %s61
      %s81 = sphi 0, %s83
      %s84 = sphi 0, %s81
      %s85 = sphi 0, %s84
      %s101 = sphi 0, %s85
      %s107 = sphi 0, %s109
      %s110 = sphi 0, %s107
      %s111 = sphi 0, %s110
      %s127 = sphi 0, %s111
      %s131 = sphi 0, %s131
      %s133 = sphi 0, %s131
      %s134 = sphi 0, %s133
      %s148 = sphi 0, %s134
      %s156 = sphi 0, %s158
      %s159 = sphi 0, %s156
      %s160 = sphi 0, %s159
      %s176 = sphi 0, %s160
    $region4: #{tpu_custom_call.1} parent=1 // loop_header_branch
      %20 = sbr.rel (%p18) target = $region8
    $region5: #{tpu_custom_call.1} parent=1 // loop_body
      %s22 = ssub.s32 %s17, 1
      %s23 = ssub.s32 %s17, 2
      %s30 = sadd.s32 1, %s25
      %p31 = scmp.ge.s32.totalorder %s30, 1
      %s32 = scalar_select %p31, 0, %s30
      %s33 = sadd.s32 1, %s24
      %s34 = scalar_select %p31, %s33, %s24
      %p35 = scmp.ge.s32.totalorder %s34, 3
      %s36 = scalar_select %p35, 0, %s34
      %s38 = sadd.s32 %s37, 1
      %p41 = scmp.eq.s32.totalorder %s17, 2
      %p42 = scmp.ne.s32.totalorder %s37, %s39
      %p43 = scmp.eq.s32.totalorder %s17, 0
      %p44 = por %p42, %p43
      %p45 = scmp.ne.s32.totalorder %s37, %s39
      %p46 = scmp.eq.s32.totalorder %s22, 2
      %p47 = por %p45, %p46
      %p48 = scmp.ne.s32.totalorder %s39, %s40
      %p49 = scmp.eq.s32.totalorder %s22, 0
      %p50 = por %p48, %p49
      %p51 = scmp.ne.s32.totalorder %s39, %s40
      %p52 = scmp.eq.s32.totalorder %s23, 2
      %p53 = por %p51, %p52
      %p55 = scmp.ne.s32.totalorder %s40, %s54
      %p56 = scmp.eq.s32.totalorder %s23, 0
      %p57 = por %p55, %p56
      %s59 = sadd.s32 %s58, 1
      %p62 = scmp.eq.s32.totalorder %s17, 2
      %p63 = scmp.ne.s32.totalorder %s58, %s60
      %p64 = scmp.eq.s32.totalorder %s17, 0
      %p65 = por %p63, %p64
      %p66 = scmp.ne.s32.totalorder %s58, %s60
      %p67 = scmp.eq.s32.totalorder %s22, 2
      %p68 = por %p66, %p67
      %p69 = scmp.ne.s32.totalorder %s60, %s61
      %p70 = scmp.eq.s32.totalorder %s22, 0
      %p71 = por %p69, %p70
      %p72 = scmp.ne.s32.totalorder %s60, %s61
      %p73 = scmp.eq.s32.totalorder %s23, 2
      %p74 = por %p72, %p73
      %p76 = scmp.ne.s32.totalorder %s61, %s75
      %p77 = scmp.eq.s32.totalorder %s23, 0
      %p78 = por %p76, %p77
      %s79 = ssub.s32 %s24, %s36
      %p80 = scmp.eq.s32.totalorder %s79, 0
      %s82 = sadd.s32 %s81, 1
      %s83 = scalar_select %p80, %s81, %s82
      %p86 = pneg %p80
      %p87 = scmp.eq.s32.totalorder %s17, 2
      %p88 = por %p86, %p87
      %p89 = scmp.ne.s32.totalorder %s81, %s84
      %p90 = scmp.eq.s32.totalorder %s17, 0
      %p91 = por %p89, %p90
      %p92 = scmp.ne.s32.totalorder %s81, %s84
      %p93 = scmp.eq.s32.totalorder %s22, 2
      %p94 = por %p92, %p93
      %p95 = scmp.ne.s32.totalorder %s84, %s85
      %p96 = scmp.eq.s32.totalorder %s22, 0
      %p97 = por %p95, %p96
      %p98 = scmp.ne.s32.totalorder %s84, %s85
      %p99 = scmp.eq.s32.totalorder %s23, 2
      %p100 = por %p98, %p99
      %p102 = scmp.ne.s32.totalorder %s85, %s101
      %p103 = scmp.eq.s32.totalorder %s23, 0
      %p104 = por %p102, %p103
      %s105 = ssub.s32 %s25, %s32
      %p106 = scmp.eq.s32.totalorder %s105, 0
      %s108 = sadd.s32 %s107, 1
      %s109 = scalar_select %p106, %s107, %s108
      %p112 = pneg %p106
      %p113 = scmp.eq.s32.totalorder %s17, 2
      %p114 = por %p112, %p113
      %p115 = scmp.ne.s32.totalorder %s107, %s110
      %p116 = scmp.eq.s32.totalorder %s17, 0
      %p117 = por %p115, %p116
      %p118 = scmp.ne.s32.totalorder %s107, %s110
      %p119 = scmp.eq.s32.totalorder %s22, 2
      %p120 = por %p118, %p119
      %p121 = scmp.ne.s32.totalorder %s110, %s111
      %p122 = scmp.eq.s32.totalorder %s22, 0
      %p123 = por %p121, %p122
      %p124 = scmp.ne.s32.totalorder %s110, %s111
      %p125 = scmp.eq.s32.totalorder %s23, 2
      %p126 = por %p124, %p125
      %p128 = scmp.ne.s32.totalorder %s111, %s127
      %p129 = scmp.eq.s32.totalorder %s23, 0
      %p130 = por %p128, %p129
      %s132 = sadd.s32 %s131, 1
      %p135 = scmp.eq.s32.totalorder %s17, 2
      %p136 = scmp.ne.s32.totalorder %s131, %s133
      %p137 = scmp.eq.s32.totalorder %s17, 0
      %p138 = por %p136, %p137
      %p139 = scmp.ne.s32.totalorder %s131, %s133
      %p140 = scmp.eq.s32.totalorder %s22, 2
      %p141 = por %p139, %p140
      %p142 = scmp.ne.s32.totalorder %s133, %s134
      %p143 = scmp.eq.s32.totalorder %s22, 0
      %p144 = por %p142, %p143
      %p145 = scmp.ne.s32.totalorder %s133, %s134
      %p146 = scmp.eq.s32.totalorder %s23, 2
      %p147 = por %p145, %p146
      %p149 = scmp.ne.s32.totalorder %s134, %s148
      %p150 = scmp.eq.s32.totalorder %s23, 0
      %p151 = por %p149, %p150
      %s152 = ssub.s32 %s24, %s36
      %s153 = ssub.s32 %s25, %s32
      %s154 = sor.u32 %s152, %s153
      %p155 = scmp.eq.s32.totalorder %s154, 0
      %s157 = sadd.s32 %s156, 1
      %s158 = scalar_select %p155, %s156, %s157
      %p161 = pneg %p155
      %p162 = scmp.eq.s32.totalorder %s17, 2
      %p163 = por %p161, %p162
      %p164 = scmp.ne.s32.totalorder %s156, %s159
      %p165 = scmp.eq.s32.totalorder %s17, 0
      %p166 = por %p164, %p165
      %p167 = scmp.ne.s32.totalorder %s156, %s159
      %p168 = scmp.eq.s32.totalorder %s22, 2
      %p169 = por %p167, %p168
      %p170 = scmp.ne.s32.totalorder %s159, %s160
      %p171 = scmp.eq.s32.totalorder %s22, 0
      %p172 = por %p170, %p171
      %p173 = scmp.ne.s32.totalorder %s159, %s160
      %p174 = scmp.eq.s32.totalorder %s23, 2
      %p175 = por %p173, %p174
      %p177 = scmp.ne.s32.totalorder %s160, %s176
      %p178 = scmp.eq.s32.totalorder %s23, 0
      %p179 = por %p177, %p178
      %p180 = scmp.le.s32.totalorder 1, %s17
      %p181 = scmp.lt.s32.totalorder %s17, 4
      %p182 = pnand %p180, %p181
      %p183 = pneg %p182
      // Predicated region
      $region9: #{tpu_custom_call.1} parent=5 // pred_check
        _
      $region10: #{tpu_custom_call.1} parent=5 // pred_check_branch
        %185 = sbr.rel (%p182) target = $region12
      $region11: #{tpu_custom_call.1} parent=5 // pred_region
        %s186 = ssub.s32 %s17, 1
        // Predicated region
        $region13: #{tpu_custom_call.1} parent=11 // pred_check
          %p187 = pneg %p50
        $region14: #{tpu_custom_call.1} parent=11 // pred_check_branch
          %189 = sbr.rel (%p187) target = $region16
        $region15: #{tpu_custom_call.1} parent=11 // pred_region
          %s191 = ssub.s32 16, 16
          %192 = vsyncadd [#allocation4], %s191
          %s194 = sshll.u32 %s1, 4
          %s195 = int_to_ptr.vmem [resolvable:$true] %s194
          %197 = dma.vmem_to_smem %s195, 16, [#allocation2], [#allocation4]
        $region16: #{tpu_custom_call.1} parent=11 // pred_fallthru
          _
        // Predicated region
        $region17: #{tpu_custom_call.1} parent=11 // pred_check
          %p198 = pneg %p71
        $region18: #{tpu_custom_call.1} parent=11 // pred_check_branch
          %200 = sbr.rel (%p198) target = $region20
        $region19: #{tpu_custom_call.1} parent=11 // pred_region
          %s202 = ssub.s32 16, 16
          %203 = vsyncadd [#allocation6], %s202
          %s205 = sshll.u32 %s2, 4
          %s206 = int_to_ptr.vmem [resolvable:$true] %s205
          %208 = dma.vmem_to_smem %s206, 16, [#allocation5], [#allocation6]
        $region20: #{tpu_custom_call.1} parent=11 // pred_fallthru
          _
        // Predicated region
        $region21: #{tpu_custom_call.1} parent=11 // pred_check
          %p209 = pneg %p123
        $region22: #{tpu_custom_call.1} parent=11 // pred_check_branch
          %211 = sbr.rel (%p209) target = $region24
        $region23: #{tpu_custom_call.1} parent=11 // pred_region
          %s212 = smul.u32 4, %s27
          %p213 = scmp.lt.s32.totalorder %s212, 3
          %s214 = scalar_select %p213, %s212, 3
          %s215 = smul.addr %s214, 4
          %s216 = scalar_lea.vmem %s4, %s215
          %s217 = smul.u32 4, %s27
        $region24: #{tpu_custom_call.1} parent=11 // pred_fallthru
          _
        // Predicated region
        $region25: #{tpu_custom_call.1} parent=11 // pred_check
          %p218 = pneg %p144
        $region26: #{tpu_custom_call.1} parent=11 // pred_check_branch
          %220 = sbr.rel (%p218) target = $region28
        $region27: #{tpu_custom_call.1} parent=11 // pred_region
          _
        $region28: #{tpu_custom_call.1} parent=11 // pred_fallthru
          _
      $region12: #{tpu_custom_call.1} parent=5 // pred_fallthru
        _
      %p221 = scmp.lt.s32.totalorder %s17, 3
      // Predicated region
      $region29: #{tpu_custom_call.1} parent=5 // pred_check
        %p222 = pneg %p221
      $region30: #{tpu_custom_call.1} parent=5 // pred_check_branch
        %224 = sbr.rel (%p222) target = $region32
      $region31: #{tpu_custom_call.1} parent=5 // pred_region
        // Predicated region
        $region33: #{tpu_custom_call.1} parent=31 // pred_check
          %p225 = pneg %p91
        $region34: #{tpu_custom_call.1} parent=31 // pred_check_branch
          %227 = sbr.rel (%p225) target = $region36
        $region35: #{tpu_custom_call.1} parent=31 // pred_region
          %p228 = scmp.lt.s32.totalorder %s24, 2
          %s229 = scalar_select %p228, %s24, 2
          %s230 = smul.addr %s229, 2
          %s231 = smul.addr %s230, 4
          %s232 = scalar_lea.vmem %s3, %s231
        $region36: #{tpu_custom_call.1} parent=31 // pred_fallthru
          _
      $region32: #{tpu_custom_call.1} parent=5 // pred_fallthru
        _
      %p233 = scmp.le.s32.totalorder 1, %s17
      %p234 = scmp.lt.s32.totalorder %s17, 4
      %p235 = pnand %p233, %p234
      %p236 = pneg %p235
      // Predicated region
      $region37: #{tpu_custom_call.1} parent=5 // pred_check
        _
      $region38: #{tpu_custom_call.1} parent=5 // pred_check_branch
        %238 = sbr.rel (%p235) target = $region40
      $region39: #{tpu_custom_call.1} parent=5 // pred_region
        %s239 = ssub.s32 %s17, 1
        // Predicated region
        $region41: #{tpu_custom_call.1} parent=39 // pred_check
          %p240 = pneg %p50
        $region42: #{tpu_custom_call.1} parent=39 // pred_check_branch
          %242 = sbr.rel (%p240) target = $region44
        $region43: #{tpu_custom_call.1} parent=39 // pred_region
          %243 = dma.done [#allocation4], 16
        $region44: #{tpu_custom_call.1} parent=39 // pred_fallthru
          _
        // Predicated region
        $region45: #{tpu_custom_call.1} parent=39 // pred_check
          %p244 = pneg %p71
        $region46: #{tpu_custom_call.1} parent=39 // pred_check_branch
          %246 = sbr.rel (%p244) target = $region48
        $region47: #{tpu_custom_call.1} parent=39 // pred_region
          %247 = dma.done [#allocation6], 16
        $region48: #{tpu_custom_call.1} parent=39 // pred_fallthru
          _
        %248 = sfence
        %p249 = pneg %p50
        %p250 = pneg %p47
        %p251 = pneg %p71
        %p252 = pneg %p68
        %p253 = scmp.lt.s32.totalorder %s26, 2
        %s254 = scalar_select %p253, %s26, 2
        %s255 = smul.addr %s254, 2
        %s256 = smul.addr %s255, 4
        %s257 = scalar_lea.vmem %s3, %s256
        %p258 = pneg %p97
        %p259 = pneg %p94
        %s260 = smul.u32 4, %s27
        %p261 = scmp.lt.s32.totalorder %s260, 3
        %s262 = scalar_select %p261, %s260, 3
        %s263 = smul.addr %s262, 4
        %s264 = scalar_lea.vmem %s4, %s263
        %p265 = pneg %p123
        %p266 = pneg %p120
        %p267 = pneg %p144
        %p268 = pneg %p141
        %p269 = pneg %p172
        %p270 = pneg %p169
        %s271 = sand.u32 %s159, 1
        %s272 = scalar_lea.sflag [#allocation3], %s271
        %s273 = sand.u32 %s159, 1
        %s274 = smul.addr %s273, 32
        %s275 = scalar_lea.vmem [#allocation7], %s274
        %p276 = scmp.lt.s32.totalorder %s26, 2
        %s277 = scalar_select %p276, %s26, 2
        %s278 = smul.addr %s277, 2
        %s279 = smul.addr %s278, 4
        %s280 = scalar_lea.vmem %s3, %s279
        %s281 = smul.u32 4, %s27
        %p282 = scmp.lt.s32.totalorder %s281, 3
        %s283 = scalar_select %p282, %s281, 3
        %s284 = smul.addr %s283, 4
        %s285 = scalar_lea.vmem %s4, %s284
        %s286 = smul.u32 4, %s27
        %s287 = smul.u32 4, %s27
        %v289 = vld [vmem:[%s280] sm:$0xf]
        %v290 = vld [vmem:[%s280 + $0x4] sm:$0xf]
        %v291 = vld [vmem:[%s285] sm:$0xf]
        %v292 = vld [vmem:[%s285 + $0x4] sm:$0xf]
        %v293 = vld [vmem:[%s285 + $0x8] sm:$0xf]
        %v294 = vld [vmem:[%s285 + $0xc] sm:$0xf]
        %v299 = vunpack.c.l.b16 %v291
        %v300 = vunpack.c.l.b16 %v292
        %v301 = vunpack.c.l.b16 %v293
        %v302 = vunpack.c.l.b16 %v294
        %v303 = vpack.c.b16 %v300, %v299
        %v304 = vpack.c.b16 %v302, %v301
        %v307 = vunpack.c.l.b16 %v289
        %v308 = vunpack.c.l.b16 %v290
        %v309 = vpack.c.b16 %v308, %v307
        %vm311 = vcmask 130048
        %v313 = vsel %vm311, %v303, 0
        %v316 = vsel %vm311, %v304, 0
        %318 = vmatprep.subr.bf16.mxu0 0
        %319 = vmatpush1.bf16.msra.mxu0 %v309
        %320 = vmatprep.subr.bf16.mxu0 0
        %321 = vmatpush1.bf16.msra.mxu0 0
        %322 = vmatprep.subr.bf16.mxu0 0
        %323 = vmatpush1.bf16.msra.mxu0 0
        %324 = vmatprep.subr.bf16.mxu0 0
        %325 = vmatpush1.bf16.msra.mxu0 0
        %326 = vmatprep.subr.bf16.mxu0 0
        %327 = vmatpush1.bf16.msra.mxu0 0
        %328 = vmatprep.subr.bf16.mxu0 0
        %329 = vmatpush1.bf16.msra.mxu0 0
        %330 = vmatprep.subr.bf16.mxu0 0
        %331 = vmatpush1.bf16.msra.mxu0 0
        %332 = vmatprep.subr.bf16.mxu0 0
        %333 = vmatpush1.bf16.msra.mxu0 0
        %334 = vmatprep.subr.bf16.mxu0 0
        %335 = vmatpush1.bf16.msra.mxu0 0
        %336 = vmatprep.subr.bf16.mxu0 0
        %337 = vmatpush1.bf16.msra.mxu0 0
        %338 = vmatprep.subr.bf16.mxu0 0
        %339 = vmatpush1.bf16.msra.mxu0 0
        %340 = vmatprep.subr.bf16.mxu0 0
        %341 = vmatpush1.bf16.msra.mxu0 0
        %342 = vmatprep.subr.bf16.mxu0 0
        %343 = vmatpush1.bf16.msra.mxu0 0
        %344 = vmatprep.subr.bf16.mxu0 0
        %345 = vmatpush1.bf16.msra.mxu0 0
        %346 = vmatprep.subr.bf16.mxu0 0
        %347 = vmatpush1.bf16.msra.mxu0 0
        %348 = vmatprep.subr.bf16.mxu0 0
        %349 = vmatpush1.bf16.msra.mxu0 0
        %350 = vmatprep.mubr.bf16.mxu0 0
        %351 = vmatmul.mubr.bf16.gmra.mrb[0].mxu0 %v313
        %v352 = vpop.f32.mrb[0].mxu0
        %v353 = vadd.f32 0.0, %v352
        %v354 = vpop.f32.mrb[0].mxu0
        %v355 = vpop.f32.mrb[0].mxu0
        %v356 = vadd.f32 0.0, %v355
        %v357 = vpop.f32.mrb[0].mxu0
        %358 = vmatprep.mubr.bf16.mxu0 0
        %359 = vmatmul.mubr.bf16.gmra.mrb[0].mxu0 %v316
        %v360 = vpop.f32.mrb[0].mxu0
        %v361 = vadd.f32 0.0, %v360
        %v362 = vpop.f32.mrb[0].mxu0
        %v363 = vpop.f32.mrb[0].mxu0
        %v364 = vadd.f32 0.0, %v363
        %v365 = vpop.f32.mrb[0].mxu0
        %366 = vdwg.mxu0
        %v367 = vpack.c.bf16 %v356, %v353
        %v368 = vpack.c.bf16 %v364, %v361
        %v369 = vld [vmem:[%s5] sm:$0xf]
        %v370 = vld [vmem:[%s5 + $0x4] sm:$0xf]
        %v371 = vld [vmem:[%s5 + $0x8] sm:$0x3]
        %v375 = vunpack.c.l.b16 %v369
        %v376 = vunpack.c.l.b16 %v370
        %v377 = vunpack.c.l.b16 %v371
        %v378 = vpack.c.b16 %v376, %v375
        %v379 = vpack.c.b16 %v377, %v377
        %vm381 = vcmask 162816
        %v383 = vsel %vm381, %v367, 0
        %v386 = vsel %vm381, %v368, 0
        %vm388 = vcmask 1041408
        %v390 = vsel %vm388, %v379, 0
        %392 = vmatprep.subr.bf16.mxu0 0
        %393 = vmatpush1.bf16.msra.mxu0 %v378
        %394 = vmatprep.subr.bf16.mxu0 0
        %395 = vmatpush1.bf16.msra.mxu0 %v390
        %396 = vmatprep.subr.bf16.mxu0 0
        %397 = vmatpush1.bf16.msra.mxu0 0
        %398 = vmatprep.subr.bf16.mxu0 0
        %399 = vmatpush1.bf16.msra.mxu0 0
        %400 = vmatprep.subr.bf16.mxu0 0
        %401 = vmatpush1.bf16.msra.mxu0 0
        %402 = vmatprep.subr.bf16.mxu0 0
        %403 = vmatpush1.bf16.msra.mxu0 0
        %404 = vmatprep.subr.bf16.mxu0 0
        %405 = vmatpush1.bf16.msra.mxu0 0
        %406 = vmatprep.subr.bf16.mxu0 0
        %407 = vmatpush1.bf16.msra.mxu0 0
        %408 = vmatprep.subr.bf16.mxu0 0
        %409 = vmatpush1.bf16.msra.mxu0 0
        %410 = vmatprep.subr.bf16.mxu0 0
        %411 = vmatpush1.bf16.msra.mxu0 0
        %412 = vmatprep.subr.bf16.mxu0 0
        %413 = vmatpush1.bf16.msra.mxu0 0
        %414 = vmatprep.subr.bf16.mxu0 0
        %415 = vmatpush1.bf16.msra.mxu0 0
        %416 = vmatprep.subr.bf16.mxu0 0
        %417 = vmatpush1.bf16.msra.mxu0 0
        %418 = vmatprep.subr.bf16.mxu0 0
        %419 = vmatpush1.bf16.msra.mxu0 0
        %420 = vmatprep.subr.bf16.mxu0 0
        %421 = vmatpush1.bf16.msra.mxu0 0
        %422 = vmatprep.subr.bf16.mxu0 0
        %423 = vmatpush1.bf16.msra.mxu0 0
        %424 = vmatprep.mubr.bf16.mxu0 0
        %425 = vmatmul.mubr.bf16.gmra.mrb[0].mxu0 %v383
        %v426 = vpop.f32.mrb[0].mxu0
        %v427 = vadd.f32 0.0, %v426
        %v428 = vpop.f32.mrb[0].mxu0
        %v429 = vpop.f32.mrb[0].mxu0
        %v430 = vadd.f32 0.0, %v429
        %v431 = vpop.f32.mrb[0].mxu0
        %432 = vmatprep.mubr.bf16.mxu0 0
        %433 = vmatmul.mubr.bf16.gmra.mrb[0].mxu0 %v386
        %v434 = vpop.f32.mrb[0].mxu0
        %v435 = vadd.f32 0.0, %v434
        %v436 = vpop.f32.mrb[0].mxu0
        %v437 = vpop.f32.mrb[0].mxu0
        %v438 = vadd.f32 0.0, %v437
        %v439 = vpop.f32.mrb[0].mxu0
        %440 = vdwg.mxu0
        %v441 = vlaneseq
        %v442 = vshrl.u32 %v441, 7
        %v443 = vadd.s32 %v442, 8
        %v444 = vadd.s32 %v442, 16
        %v445 = vadd.s32 %v442, 24
        %s446 = smul.u32 %s27, 32
        %v447 = vstv %s446
        %v448 = vadd.s32 %v442, %v447
        %v449 = vadd.s32 %v443, %v447
        %v450 = vadd.s32 %v444, %v447
        %v451 = vadd.s32 %v445, %v447
        %v452 = vlaneseq
        %v453 = vand.u32 %v452, 127
        %vm454 = vcmp.lt.s32.totalorder %v448, 24
        %vm455 = vcmp.lt.s32.totalorder %v449, 24
        %vm456 = vcmp.lt.s32.totalorder %v450, 24
        %vm457 = vcmp.lt.s32.totalorder %v451, 24
        %vm458 = vcmp.lt.s32.totalorder %v453, 30
        %vm459 = vmand %vm454, %vm458
        %vm460 = vmand %vm455, %vm458
        %vm461 = vmand %vm456, %vm458
        %vm462 = vmand %vm457, %vm458
        %s463 = sld [smem:[#allocation2 + %s26]]
        %v464 = vstv %s463
        %v465 = vmul.f32 %v427, %v464
        %v466 = vmul.f32 %v430, %v464
        %v467 = vmul.f32 %v435, %v464
        %v468 = vmul.f32 %v438, %v464
        %s469 = sld [smem:[#allocation5 + %s26]]
        %v470 = vstv %s469
        %v471 = vadd.f32 %v465, %v470
        %v472 = vadd.f32 %v466, %v470
        %v473 = vadd.f32 %v467, %v470
        %v474 = vadd.f32 %v468, %v470
        %v475 = vsel %vm459, %v471, 0.0
        %v476 = vsel %vm460, %v472, 0.0
        %v477 = vsel %vm461, %v473, 0.0
        %v478 = vsel %vm462, %v474, 0.0
        %vm479 = vcmask 261120
        %480 = vst.msk [vmem:[%s275] sm:$0xff] %vm479, %v475
        %481 = vst.msk [vmem:[%s275 + $0x8] sm:$0xff] %vm479, %v476
        %482 = vst.msk [vmem:[%s275 + $0x10] sm:$0xff] %vm479, %v477
        %483 = vst.msk [vmem:[%s275 + $0x18] sm:$0xff] %vm479, %v478
        %s484 = sand.u32 %s159, 1
        %s485 = scalar_lea.sflag [#allocation3], %s484
        %s486 = sand.u32 %s159, 1
        %s487 = smul.addr %s486, 32
        %s488 = scalar_lea.vmem [#allocation7], %s487
        // Predicated region
        $region49: #{tpu_custom_call.1} parent=39 // pred_check
          %p489 = pneg %p169
        $region50: #{tpu_custom_call.1} parent=39 // pred_check_branch
          %491 = sbr.rel (%p489) target = $region52
        $region51: #{tpu_custom_call.1} parent=39 // pred_region
          %s492 = smul.u32 4, %s27
          %s494 = ssub.s32 512, 512
          %495 = vsyncadd %s485, %s494
          %s496 = smul.addr %s26, 4
          %s497 = sadd.s32 %s492, %s496
          %s498 = smul.addr %s497, 128
          %s499 = scalar_lea.hbm %s6, %s498
          %s500 = sshll.u32 %s488, 4
          %s501 = int_to_ptr.vmem [resolvable:$true] %s500
          %506 = dma.vmem_to_hbm [thread:$0]  %s501, 512, %s499, %s485, 128, 128, 8
        $region52: #{tpu_custom_call.1} parent=39 // pred_fallthru
          _
      $region40: #{tpu_custom_call.1} parent=5 // pred_fallthru
        _
      %p507 = scmp.le.s32.totalorder 2, %s17
      // Predicated region
      $region53: #{tpu_custom_call.1} parent=5 // pred_check
        %p508 = pneg %p507
      $region54: #{tpu_custom_call.1} parent=5 // pred_check_branch
        %510 = sbr.rel (%p508) target = $region56
      $region55: #{tpu_custom_call.1} parent=5 // pred_region
        %s511 = ssub.s32 %s17, 2
        // Predicated region
        $region57: #{tpu_custom_call.1} parent=55 // pred_check
          %p512 = pneg %p175
        $region58: #{tpu_custom_call.1} parent=55 // pred_check_branch
          %514 = sbr.rel (%p512) target = $region60
        $region59: #{tpu_custom_call.1} parent=55 // pred_region
          %s515 = sand.u32 %s160, 1
          %s516 = scalar_lea.sflag [#allocation3], %s515
          %s517 = sand.u32 %s160, 1
          %s518 = smul.addr %s517, 32
          %s519 = scalar_lea.vmem [#allocation7], %s518
          %520 = dma.done %s516, 512
        $region60: #{tpu_custom_call.1} parent=55 // pred_fallthru
          _
      $region56: #{tpu_custom_call.1} parent=5 // pred_fallthru
        _
    $region6: #{tpu_custom_call.1} parent=1 // loop_footer
      %s21 = sadd.s32 1, %s17
    $region7: #{tpu_custom_call.1} parent=1 // loop_footer_branch
      %16 = sbr.rel target = $region3
    $region8: #{tpu_custom_call.1} parent=1 // loop_exit
      _
    %521 = vsyncpa [#allocation3], 1
    %s522 = scalar_lea.sflag [#allocation3], 1
    %523 = vsyncpa %s522, 1
    %524 = vsyncpa [#allocation4], 1
    %s525 = scalar_lea.sflag [#allocation4], 1
    %526 = vsyncpa %s525, 1
    %527 = vsyncpa [#allocation6], 1

</llo_original>
